<compile_context>
chip_gen: v5e
topology: v5e:2x2
jax: 0.10.0
libtpu: 0.0.40
codegen_flags: <defaults>
</compile_context>

<pallas_src>
import functools

import jax
import jax.numpy as jnp
from jax.experimental import pallas as pl
from jax.experimental.pallas import tpu as pltpu


def _round_up(x, m):
    return (x + m - 1) // m * m


def _cdiv(a, b):
    return -(-a // b)


def _vmem_capacity_bytes():
    """Physical VMEM per core (128 MiB v5e/v6e, 64 MiB v7x); safe fallback."""
    try:
        info = pltpu.get_tpu_info()
        for attr in ("vmem_capacity_bytes", "vmem_bytes", "vmem_size_bytes"):
            v = getattr(info, attr, None)
            if v:
                return int(v)
    except Exception:
        pass
    return 64 * 2 ** 20  # conservative: never exceeds any current chip


def _conv_tbc_kernel(x_ref, xh_ref, w_ref, b_ref, o_ref, *, row_stride):
    """One (cout-tile, time-tile) grid step.

    x_ref  : (M, C_in_p)       current time tile (M = T_tile * B_pad rows)
    xh_ref : (H, C_in_p)       halo = leading rows of the *next* time tile
    w_ref  : (K, C_in_p, N)    weights for this C_out tile (resident)
    b_ref  : (1, N)            bias for this C_out tile (resident)
    o_ref  : (M, N)            output tile
    row_stride: padded rows per time step (multiple of the sublane packing)
    """
    K = w_ref.shape[0]
    M = o_ref.shape[0]

    # Tap 0 reads the tile directly; accumulate in registers (f32 MXU acc).
    acc = jnp.dot(x_ref[...], w_ref[0], preferred_element_type=jnp.float32)

    # Taps k >= 1: rows [off, M) come from this tile, rows [M, M + off) from the
    # halo view of the next tile.  `off` is a static multiple of the sublane
    # packing, so both slices and the concat are aligned (no masked loads or
    # relayout) and each tap is a single MXU matmul.  No VMEM scratch round-trip.
    for k in range(1, K):
        off = k * row_stride
        head = x_ref[pl.ds(off, M - off), :]
        tail = xh_ref[pl.ds(0, off), :]
        xk = jnp.concatenate([head, tail], axis=0)
        acc = acc + jnp.dot(xk, w_ref[k], preferred_element_type=jnp.float32)

    # Bias add + downcast exactly once per output tile (lane-dense store).
    o_ref[...] = (acc + b_ref[...]).astype(o_ref.dtype)


def conv_tbc(x, weight, bias, padding=0, *, rows_per_tile=2048):
    """JAX/Pallas equivalent of torch.conv_tbc(x, weight, bias, padding)."""
    T, B, C_in = x.shape
    K, C_in_w, C_out = weight.shape
    assert C_in == C_in_w, "weight in_channels mismatch"
    T_out = T + 2 * padding - K + 1
    assert T_out >= 1, "invalid time_out"

    in_b = jnp.dtype(x.dtype).itemsize
    w_b = jnp.dtype(weight.dtype).itemsize
    out_b = in_b

    # ---- sublane packing / lane-dense channel padding -----------------------
    packing = 32 // in_b                        # 8 (f32) / 16 (bf16) / 32 (int8)
    B_pad = _round_up(B, packing)               # aligned per-time row stride
    C_in_p = _round_up(C_in, 128)

    # ---- VMEM budget per chip generation -------------------------------------
    vmem_cap = _vmem_capacity_bytes()
    vmem_ceiling = (3 * vmem_cap) // 4          # ~96 MiB v5e/v6e, ~48 MiB v7x
    tile_budget = vmem_ceiling // 2             # tiles use half; rest = headroom

    # ---- C_out tiling: prefer full weight residency --------------------------
    c_out_128 = _round_up(C_out, 128)
    full_w_bytes = 2 * K * C_in_p * c_out_128 * w_b      # double-buffered
    if full_w_bytes <= tile_budget // 2:
        cout_tile = c_out_128                   # n_co == 1 -> weight stays resident
    else:
        cout_tile = 256 if c_out_128 % 256 == 0 else 128
    C_out_p = _round_up(C_out, cout_tile)
    n_co = C_out_p // cout_tile

    # ---- time tiling ----------------------------------------------------------
    t_align = max(K - 1, 1)                     # makes M % halo_rows == 0
    halo_rows = t_align * B_pad                 # sublane-packing aligned

    def tile_bytes(tt):
        m = tt * B_pad
        return (2 * m * C_in_p * in_b                 # x tile (double-buffered)
                + 2 * halo_rows * C_in_p * in_b       # halo
                + 2 * K * C_in_p * cout_tile * w_b    # weight tile
                + 2 * cout_tile * w_b                 # bias
                + 2 * m * cout_tile * out_b)          # out tile

    T_tile = max(t_align, rows_per_tile // B_pad)
    T_tile = min(_round_up(T_tile, t_align), _round_up(T_out, t_align))
    while T_tile > t_align and tile_bytes(T_tile) > tile_budget:
        T_tile = max(t_align, _round_up(T_tile // 2, t_align))
    n_t = _cdiv(T_out, T_tile)

    # Expose >= 2 grid steps when possible so v7x's two TensorCores both work.
    if n_co * n_t < 2 and T_out > t_align:
        T_tile = _round_up(_cdiv(T_out, 2), t_align)
        n_t = _cdiv(T_out, T_tile)

    M = T_tile * B_pad                          # rows per output tile
    halo_stride = M // halo_stride if False else M // halo_rows  # integer by construction

    # ---- pad + flatten x (single fused XLA pad; reshape is free) -------------
    t_rows = n_t * T_tile + t_align             # tiles + trailing halo block
    pad_hi = t_rows - T - padding               # >= padding, by construction
    x_p = jnp.pad(x, ((padding, pad_hi), (0, B_pad - B), (0, C_in_p - C_in)))
    x2d = x_p.reshape(t_rows * B_pad, C_in_p)   # contiguous (T, B)->rows flatten

    w_p = jnp.pad(weight, ((0, 0), (0, C_in_p - C_in), (0, C_out_p - C_out)))
    b_p = jnp.pad(bias, (0, C_out_p - C_out)).reshape(1, C_out_p)

    vmem_limit = int(min(vmem_ceiling,
                         max(32 * 2 ** 20, 2 * tile_bytes(T_tile))))

    cost = pl.CostEstimate(
        flops=2 * K * n_t * M * C_in_p * C_out_p,
        transcendentals=0,
        bytes_accessed=(n_co * x2d.size * in_b                  # x per cout pass
                        + n_co * n_t * halo_rows * C_in_p * in_b  # halo re-reads
                        + w_p.size * w_b                          # weight once
                        + b_p.size * jnp.dtype(bias.dtype).itemsize
                        + n_t * M * C_out_p * out_b),
    )

    out2d = pl.pallas_call(
        functools.partial(_conv_tbc_kernel, row_stride=B_pad),
        out_shape=jax.ShapeDtypeStruct((n_t * M, C_out_p), x.dtype),
        grid_spec=pltpu.PrefetchScalarGridSpec(
            num_scalar_prefetch=0,
            # Outer axis = C_out tiles: weight/bias block indices depend only on
            # the outer index -> fetched exactly n_co times (fully resident when
            # n_co == 1).  Inner axis streams the time tiles of x.
            grid=(n_co, n_t),
            in_specs=[
                # current time tile of flattened rows
                pl.BlockSpec((M, C_in_p), lambda i, j: (j, 0)),
                # halo: leading rows of the *next* time tile (same array)
                pl.BlockSpec((halo_rows, C_in_p),
                             lambda i, j: ((j + 1) * halo_stride, 0)),
                # resident weight / bias per C_out tile
                pl.BlockSpec((K, C_in_p, cout_tile), lambda i, j: (0, 0, i)),
                pl.BlockSpec((1, cout_tile), lambda i, j: (0, i)),
            ],
            out_specs=pl.BlockSpec((M, cout_tile), lambda i, j: (j, i)),
        ),
        compiler_params=pltpu.CompilerParams(
            dimension_semantics=("parallel", "parallel"),
            vmem_limit_bytes=vmem_limit,
        ),
        cost_estimate=cost,
    )(x2d, x2d, w_p, b_p)

    out = out2d.reshape(n_t * T_tile, B_pad, C_out_p)
    return out[:T_out, :B, :C_out]


def conv_tbc_ref(x, weight, bias, padding=0):
    """Pure-JAX reference for correctness checking."""
    K = weight.shape[0]
    x_pad = jnp.pad(x, ((padding, padding), (0, 0), (0, 0)))
    T_out = x_pad.shape[0] - K + 1
    out = jnp.zeros((T_out, x.shape[1], weight.shape[2]), jnp.float32)
    for k in range(K):
        out = out + jnp.einsum(
            "tbi,io->tbo", x_pad[k:k + T_out], weight[k],
            preferred_element_type=jnp.float32)
    return (out + bias[None, None, :]).astype(x.dtype)


if __name__ == "__main__":
    # Module hyperparameters (small, synthetic) matching ConvTBC.__init__.
    in_channels, out_channels, kernel_size, padding = 16, 32, 3, 1
    T, B = 8, 2  # time, batch

    key = jax.random.PRNGKey(0)
    kx, kw, kb = jax.random.split(key, 3)

    weight = jax.random.normal(kw, (kernel_size, in_channels, out_channels),
                               jnp.float32) * 0.1
    bias = jax.random.normal(kb, (out_channels,), jnp.float32) * 0.1
    x = jax.random.normal(kx, (T, B, in_channels), jnp.float32)  # TBC layout

    out = conv_tbc(x, weight, bias, padding)
    out = jax.block_until_ready(out)

    ref = conv_tbc_ref(x, weight, bias, padding)
    assert out.shape == (T + 2 * padding - kernel_size + 1, B, out_channels)
    assert jnp.allclose(out, ref, atol=1e-5, rtol=1e-5), "mismatch vs reference"

    print("KERNEL_OK")
</pallas_src>

<mosaic_0001>
module attributes {stable_mosaic.version = 11 : i64} {
  func.func @_conv_tbc_kernel(%arg0: i32, %arg1: i32, %arg2: memref<32x128xf32, #tpu.memory_space<vmem>>, %arg3: memref<16x128xf32, #tpu.memory_space<vmem>>, %arg4: memref<3x128x128xf32, #tpu.memory_space<vmem>>, %arg5: memref<1x128xf32, #tpu.memory_space<vmem>>, %arg6: memref<32x128xf32, #tpu.memory_space<vmem>>) attributes {dimension_semantics = [#tpu.dimension_semantics<parallel>, #tpu.dimension_semantics<parallel>], iteration_bounds = array<i64: 1, 2>, scalar_prefetch = 0 : i64, scratch_operands = 0 : i64, tpu.core_type = #tpu.core_type<tc>, window_params = [{transform_indices = @transform_0, window_bounds = array<i64: 32, 128>}, {transform_indices = @transform_1, window_bounds = array<i64: 16, 128>}, {transform_indices = @transform_2, window_bounds = array<i64: 3, 128, 128>}, {transform_indices = @transform_3, window_bounds = array<i64: 1, 128>}, {transform_indices = @transform_4, window_bounds = array<i64: 32, 128>}]} {
    %c0 = arith.constant 0 : index
    %c0_0 = arith.constant 0 : index
    %0 = vector.load %arg2[%c0, %c0_0] : memref<32x128xf32, #tpu.memory_space<vmem>>, vector<32x128xf32>
    %c0_1 = arith.constant 0 : index
    %c0_2 = arith.constant 0 : index
    %c0_3 = arith.constant 0 : index
    %1 = vector.load %arg4[%c0_1, %c0_2, %c0_3] : memref<3x128x128xf32, #tpu.memory_space<vmem>>, vector<1x128x128xf32>
    %2 = vector.shape_cast %1 : vector<1x128x128xf32> to vector<128x128xf32>
    %cst = arith.constant dense<0.000000e+00> : vector<32x128xf32>
    %3 = tpu.matmul %0, %2, %cst {dimension_numbers = #tpu.dot_dimension_numbers<[1], [0], [0], [1], [0, 0, 1, 1], [], []>} : vector<32x128xf32>, vector<128x128xf32>, vector<32x128xf32> -> vector<32x128xf32>
    %c8 = arith.constant 8 : index
    %c0_4 = arith.constant 0 : index
    %4 = vector.load %arg2[%c8, %c0_4] : memref<32x128xf32, #tpu.memory_space<vmem>>, vector<24x128xf32>
    %c0_5 = arith.constant 0 : index
    %c0_6 = arith.constant 0 : index
    %5 = vector.load %arg3[%c0_5, %c0_6] : memref<16x128xf32, #tpu.memory_space<vmem>>, vector<8x128xf32>
    %6 = tpu.concatenate %4, %5 in 0 : vector<24x128xf32>, vector<8x128xf32> -> vector<32x128xf32>
    %c1 = arith.constant 1 : index
    %c0_7 = arith.constant 0 : index
    %c0_8 = arith.constant 0 : index
    %7 = vector.load %arg4[%c1, %c0_7, %c0_8] : memref<3x128x128xf32, #tpu.memory_space<vmem>>, vector<1x128x128xf32>
    %8 = vector.shape_cast %7 : vector<1x128x128xf32> to vector<128x128xf32>
    %cst_9 = arith.constant dense<0.000000e+00> : vector<32x128xf32>
    %9 = tpu.matmul %6, %8, %cst_9 {dimension_numbers = #tpu.dot_dimension_numbers<[1], [0], [0], [1], [0, 0, 1, 1], [], []>} : vector<32x128xf32>, vector<128x128xf32>, vector<32x128xf32> -> vector<32x128xf32>
    %10 = arith.addf %3, %9 : vector<32x128xf32>
    %c16 = arith.constant 16 : index
    %c0_10 = arith.constant 0 : index
    %11 = vector.load %arg2[%c16, %c0_10] : memref<32x128xf32, #tpu.memory_space<vmem>>, vector<16x128xf32>
    %c0_11 = arith.constant 0 : index
    %c0_12 = arith.constant 0 : index
    %12 = vector.load %arg3[%c0_11, %c0_12] : memref<16x128xf32, #tpu.memory_space<vmem>>, vector<16x128xf32>
    %13 = tpu.concatenate %11, %12 in 0 : vector<16x128xf32>, vector<16x128xf32> -> vector<32x128xf32>
    %c2 = arith.constant 2 : index
    %c0_13 = arith.constant 0 : index
    %c0_14 = arith.constant 0 : index
    %14 = vector.load %arg4[%c2, %c0_13, %c0_14] : memref<3x128x128xf32, #tpu.memory_space<vmem>>, vector<1x128x128xf32>
    %15 = vector.shape_cast %14 : vector<1x128x128xf32> to vector<128x128xf32>
    %cst_15 = arith.constant dense<0.000000e+00> : vector<32x128xf32>
    %16 = tpu.matmul %13, %15, %cst_15 {dimension_numbers = #tpu.dot_dimension_numbers<[1], [0], [0], [1], [0, 0, 1, 1], [], []>} : vector<32x128xf32>, vector<128x128xf32>, vector<32x128xf32> -> vector<32x128xf32>
    %17 = arith.addf %10, %16 : vector<32x128xf32>
    %c0_16 = arith.constant 0 : index
    %c0_17 = arith.constant 0 : index
    %18 = vector.load %arg5[%c0_16, %c0_17] : memref<1x128xf32, #tpu.memory_space<vmem>>, vector<1x128xf32>
    %19 = vector.broadcast %18 : vector<1x128xf32> to vector<32x128xf32>
    %20 = arith.addf %17, %19 : vector<32x128xf32>
    %c0_18 = arith.constant 0 : index
    %c0_19 = arith.constant 0 : index
    %21 = vector.load %arg6[%c0_18, %c0_19] : memref<32x128xf32, #tpu.memory_space<vmem>>, vector<32x128xf32>
    tpu.vector_store %arg6[%c0_18, %c0_19], %20 {strides = array<i32>} : memref<32x128xf32, #tpu.memory_space<vmem>>, vector<32x128xf32>,
    return
  }
  func.func @transform_0(%arg0: i32, %arg1: i32) -> (i32, i32) {
    %c0_i32 = arith.constant 0 : i32
    %c0_i32_0 = arith.constant 0 : i32
    return %arg1, %c0_i32 : i32, i32
  }
  func.func @transform_1(%arg0: i32, %arg1: i32) -> (i32, i32) {
    %c1_i32 = arith.constant 1 : i32
    %0 = arith.addi %arg1, %c1_i32 : i32
    %c2_i32 = arith.constant 2 : i32
    %1 = arith.muli %0, %c2_i32 : i32
    %c0_i32 = arith.constant 0 : i32
    %c0_i32_0 = arith.constant 0 : i32
    return %1, %c0_i32 : i32, i32
  }
  func.func @transform_2(%arg0: i32, %arg1: i32) -> (i32, i32, i32) {
    %c0_i32 = arith.constant 0 : i32
    %c0_i32_0 = arith.constant 0 : i32
    %c0_i32_1 = arith.constant 0 : i32
    return %c0_i32, %c0_i32_0, %arg0 : i32, i32, i32
  }
  func.func @transform_3(%arg0: i32, %arg1: i32) -> (i32, i32) {
    %c0_i32 = arith.constant 0 : i32
    %c0_i32_0 = arith.constant 0 : i32
    return %c0_i32, %arg0 : i32, i32
  }
  func.func @transform_4(%arg0: i32, %arg1: i32) -> (i32, i32) {
    %c0_i32 = arith.constant 0 : i32
    return %arg1, %arg0 : i32, i32
  }
}

</mosaic_0001>

<llo_original>
// kernel: tpu_custom_call.1
$region0: #{tpu_custom_call.1}
  #allocation0 [shape = 'u32[]', space=smem, size = 0x4, offset = 0x4, fixed_abs, tag = 'smem constant byte address 0x4 - core index']
  #allocation1 [shape = 'u32[72,128]{1,0:T(1,128)}', space=vmem, size = 0x9000, scoped, tag = 'internal scratch']
  %s0 = inlined_call_operand.hbm [shape: f32[80,128], index: 0, kind: input, shape index: {}]
  %s1 = inlined_call_operand.hbm [shape: f32[80,128], index: 1, kind: input, shape index: {}]
  %s2 = inlined_call_operand.hbm [shape: f32[3,128,128], index: 2, kind: input, shape index: {}]
  %s3 = inlined_call_operand.vmem [shape: f32[1,128], index: 3, kind: input, shape index: {}]
  %s4 = inlined_call_operand.hbm [shape: f32[64,128], index: 4, kind: output, shape index: {}]
  %s5 = sld [smem:[#allocation0]]
  $region61: #{tpu_custom_call.1} parent=0
    _
  %s7 = ssub.s32 1, %s5
  %s8 = scalar_select 0, %s7, %s5
  $region1: #{tpu_custom_call.1} parent=0
    #allocation2 [shape = 'u8[32768]{0}', space=vmem, size = 0x8000, scoped, tag = 'input window, operand 0']
    #allocation3 [shape = 's32[2]{0}', space=sflag, size = 0x8, scoped, tag = 'scoped memory for tpu_custom_call.1']
    #allocation4 [shape = 's32[2]{0}', space=sflag, size = 0x8, scoped, tag = 'scoped memory for tpu_custom_call.1']
    #allocation5 [shape = 'u8[16384]{0}', space=vmem, size = 0x4000, scoped, tag = 'input window, operand 1']
    #allocation6 [shape = 's32[2]{0}', space=sflag, size = 0x8, scoped, tag = 'scoped memory for tpu_custom_call.1']
    #allocation7 [shape = 'u8[196608]{0}', space=vmem, size = 0x30000, scoped, tag = 'input window, operand 2, single buffered']
    #allocation8 [shape = 'u8[32768]{0}', space=vmem, size = 0x8000, scoped, tag = 'output window, operand 0']
    %9 = vsyncpa [#allocation3], 0
    %s10 = scalar_lea.sflag [#allocation3], 1
    %11 = vsyncpa %s10, 0
    %12 = vsyncpa [#allocation6], 0
    %s13 = scalar_lea.sflag [#allocation6], 1
    %14 = vsyncpa %s13, 0
    %15 = vsyncpa [#allocation4], 0
    %s16 = scalar_lea.sflag [#allocation4], 1
    %17 = vsyncpa %s16, 0
    loop: start=0, step=1, limit=4
    $region2: #{tpu_custom_call.1} parent=1 // loop_pre_header
      _
    $region3: #{tpu_custom_call.1} parent=1 // loop_header
      %s19 = sphi 0, %s23
      %p20 = scmp.ge.s32.totalorder %s19, 4
      %s26 = sphi 0, %s38
      %s27 = sphi 0, %s34
      %s28 = sphi 0, %s26
      %s29 = sphi 0, %s27
      %s30 = sphi 0, %s28
      %s31 = sphi 0, %s29
      %s41 = sphi 0, %s43
      %s44 = sphi 0, %s41
      %s45 = sphi 0, %s44
      %s61 = sphi 0, %s45
      %s71 = sphi 0, %s73
      %s74 = sphi 0, %s71
      %s75 = sphi 0, %s74
      %s91 = sphi 0, %s75
      %s97 = sphi 0, %s99
      %s100 = sphi 0, %s97
      %s101 = sphi 0, %s100
      %s117 = sphi 0, %s101
      %s123 = sphi 0, %s125
      %s126 = sphi 0, %s123
      %s127 = sphi 0, %s126
      %s143 = sphi 0, %s127
      %s151 = sphi 0, %s153
      %s154 = sphi 0, %s151
      %s155 = sphi 0, %s154
      %s171 = sphi 0, %s155
    $region4: #{tpu_custom_call.1} parent=1 // loop_header_branch
      %22 = sbr.rel (%p20) target = $region8
    $region5: #{tpu_custom_call.1} parent=1 // loop_body
      %s24 = ssub.s32 %s19, 1
      %s25 = ssub.s32 %s19, 2
      %s32 = sadd.s32 1, %s27
      %p33 = scmp.ge.s32.totalorder %s32, 2
      %s34 = scalar_select %p33, 0, %s32
      %s35 = sadd.s32 1, %s26
      %s36 = scalar_select %p33, %s35, %s26
      %p37 = scmp.ge.s32.totalorder %s36, 1
      %s38 = scalar_select %p37, 0, %s36
      %s39 = ssub.s32 %s27, %s34
      %p40 = scmp.eq.s32.totalorder %s39, 0
      %s42 = sadd.s32 %s41, 1
      %s43 = scalar_select %p40, %s41, %s42
      %p46 = pneg %p40
      %p47 = scmp.eq.s32.totalorder %s19, 1
      %p48 = por %p46, %p47
      %p49 = scmp.ne.s32.totalorder %s41, %s44
      %p50 = scmp.eq.s32.totalorder %s19, 0
      %p51 = por %p49, %p50
      %p52 = scmp.ne.s32.totalorder %s41, %s44
      %p53 = scmp.eq.s32.totalorder %s24, 1
      %p54 = por %p52, %p53
      %p55 = scmp.ne.s32.totalorder %s44, %s45
      %p56 = scmp.eq.s32.totalorder %s24, 0
      %p57 = por %p55, %p56
      %p58 = scmp.ne.s32.totalorder %s44, %s45
      %p59 = scmp.eq.s32.totalorder %s25, 1
      %p60 = por %p58, %p59
      %p62 = scmp.ne.s32.totalorder %s45, %s61
      %p63 = scmp.eq.s32.totalorder %s25, 0
      %p64 = por %p62, %p63
      %s65 = sadd.s32 %s27, 1
      %s66 = smul.u32 %s65, 2
      %s67 = sadd.s32 %s34, 1
      %s68 = smul.u32 %s67, 2
      %s69 = ssub.s32 %s66, %s68
      %p70 = scmp.eq.s32.totalorder %s69, 0
      %s72 = sadd.s32 %s71, 1
      %s73 = scalar_select %p70, %s71, %s72
      %p76 = pneg %p70
      %p77 = scmp.eq.s32.totalorder %s19, 1
      %p78 = por %p76, %p77
      %p79 = scmp.ne.s32.totalorder %s71, %s74
      %p80 = scmp.eq.s32.totalorder %s19, 0
      %p81 = por %p79, %p80
      %p82 = scmp.ne.s32.totalorder %s71, %s74
      %p83 = scmp.eq.s32.totalorder %s24, 1
      %p84 = por %p82, %p83
      %p85 = scmp.ne.s32.totalorder %s74, %s75
      %p86 = scmp.eq.s32.totalorder %s24, 0
      %p87 = por %p85, %p86
      %p88 = scmp.ne.s32.totalorder %s74, %s75
      %p89 = scmp.eq.s32.totalorder %s25, 1
      %p90 = por %p88, %p89
      %p92 = scmp.ne.s32.totalorder %s75, %s91
      %p93 = scmp.eq.s32.totalorder %s25, 0
      %p94 = por %p92, %p93
      %s95 = ssub.s32 %s26, %s38
      %p96 = scmp.eq.s32.totalorder %s95, 0
      %s98 = sadd.s32 %s97, 1
      %s99 = scalar_select %p96, %s97, %s98
      %p102 = pneg %p96
      %p103 = scmp.eq.s32.totalorder %s19, 1
      %p104 = por %p102, %p103
      %p105 = scmp.ne.s32.totalorder %s97, %s100
      %p106 = scmp.eq.s32.totalorder %s19, 0
      %p107 = por %p105, %p106
      %p108 = scmp.ne.s32.totalorder %s97, %s100
      %p109 = scmp.eq.s32.totalorder %s24, 1
      %p110 = por %p108, %p109
      %p111 = scmp.ne.s32.totalorder %s100, %s101
      %p112 = scmp.eq.s32.totalorder %s24, 0
      %p113 = por %p111, %p112
      %p114 = scmp.ne.s32.totalorder %s100, %s101
      %p115 = scmp.eq.s32.totalorder %s25, 1
      %p116 = por %p114, %p115
      %p118 = scmp.ne.s32.totalorder %s101, %s117
      %p119 = scmp.eq.s32.totalorder %s25, 0
      %p120 = por %p118, %p119
      %s121 = ssub.s32 %s26, %s38
      %p122 = scmp.eq.s32.totalorder %s121, 0
      %s124 = sadd.s32 %s123, 1
      %s125 = scalar_select %p122, %s123, %s124
      %p128 = pneg %p122
      %p129 = scmp.eq.s32.totalorder %s19, 1
      %p130 = por %p128, %p129
      %p131 = scmp.ne.s32.totalorder %s123, %s126
      %p132 = scmp.eq.s32.totalorder %s19, 0
      %p133 = por %p131, %p132
      %p134 = scmp.ne.s32.totalorder %s123, %s126
      %p135 = scmp.eq.s32.totalorder %s24, 1
      %p136 = por %p134, %p135
      %p137 = scmp.ne.s32.totalorder %s126, %s127
      %p138 = scmp.eq.s32.totalorder %s24, 0
      %p139 = por %p137, %p138
      %p140 = scmp.ne.s32.totalorder %s126, %s127
      %p141 = scmp.eq.s32.totalorder %s25, 1
      %p142 = por %p140, %p141
      %p144 = scmp.ne.s32.totalorder %s127, %s143
      %p145 = scmp.eq.s32.totalorder %s25, 0
      %p146 = por %p144, %p145
      %s147 = ssub.s32 %s27, %s34
      %s148 = ssub.s32 %s26, %s38
      %s149 = sor.u32 %s147, %s148
      %p150 = scmp.eq.s32.totalorder %s149, 0
      %s152 = sadd.s32 %s151, 1
      %s153 = scalar_select %p150, %s151, %s152
      %p156 = pneg %p150
      %p157 = scmp.eq.s32.totalorder %s19, 1
      %p158 = por %p156, %p157
      %p159 = scmp.ne.s32.totalorder %s151, %s154
      %p160 = scmp.eq.s32.totalorder %s19, 0
      %p161 = por %p159, %p160
      %p162 = scmp.ne.s32.totalorder %s151, %s154
      %p163 = scmp.eq.s32.totalorder %s24, 1
      %p164 = por %p162, %p163
      %p165 = scmp.ne.s32.totalorder %s154, %s155
      %p166 = scmp.eq.s32.totalorder %s24, 0
      %p167 = por %p165, %p166
      %p168 = scmp.ne.s32.totalorder %s154, %s155
      %p169 = scmp.eq.s32.totalorder %s25, 1
      %p170 = por %p168, %p169
      %p172 = scmp.ne.s32.totalorder %s155, %s171
      %p173 = scmp.eq.s32.totalorder %s25, 0
      %p174 = por %p172, %p173
      %p175 = scmp.le.s32.totalorder 1, %s19
      %p176 = scmp.lt.s32.totalorder %s19, 3
      %p177 = pnand %p175, %p176
      %p178 = pneg %p177
      // Predicated region
      $region9: #{tpu_custom_call.1} parent=5 // pred_check
        _
      $region10: #{tpu_custom_call.1} parent=5 // pred_check_branch
        %180 = sbr.rel (%p177) target = $region12
      $region11: #{tpu_custom_call.1} parent=5 // pred_region
        %s181 = ssub.s32 %s19, 1
        // Predicated region
        $region13: #{tpu_custom_call.1} parent=11 // pred_check
          %p182 = pneg %p113
        $region14: #{tpu_custom_call.1} parent=11 // pred_check_branch
          %184 = sbr.rel (%p182) target = $region16
        $region15: #{tpu_custom_call.1} parent=11 // pred_region
          %186 = vsyncadd [#allocation6], 0
          %s187 = smul.addr %s28, 8
          %s188 = scalar_lea.hbm %s2, %s187
          %s189 = sshll.u32 %s188, 4
          %s190 = int_to_ptr.hbm [resolvable:$true] %s189
          %s191 = sshll.u32 [#allocation7], 4
          %s192 = int_to_ptr.vmem [resolvable:$true] %s191
          %197 = dma.hbm_to_vmem [thread:$0]  %s190, 6144, %s192, [#allocation6], 128, 128, 8
        $region16: #{tpu_custom_call.1} parent=11 // pred_fallthru
          _
        // Predicated region
        $region17: #{tpu_custom_call.1} parent=11 // pred_check
          %p198 = pneg %p139
        $region18: #{tpu_custom_call.1} parent=11 // pred_check_branch
          %200 = sbr.rel (%p198) target = $region20
        $region19: #{tpu_custom_call.1} parent=11 // pred_region
          %p201 = scmp.lt.s32.totalorder %s28, 0
          %s202 = scalar_select %p201, %s28, 0
          %s203 = scalar_lea.vmem %s3, %s202
        $region20: #{tpu_custom_call.1} parent=11 // pred_fallthru
          _
      $region12: #{tpu_custom_call.1} parent=5 // pred_fallthru
        _
      %p204 = scmp.lt.s32.totalorder %s19, 2
      // Predicated region
      $region21: #{tpu_custom_call.1} parent=5 // pred_check
        %p205 = pneg %p204
      $region22: #{tpu_custom_call.1} parent=5 // pred_check_branch
        %207 = sbr.rel (%p205) target = $region24
      $region23: #{tpu_custom_call.1} parent=5 // pred_region
        // Predicated region
        $region25: #{tpu_custom_call.1} parent=23 // pred_check
          %p208 = pneg %p51
        $region26: #{tpu_custom_call.1} parent=23 // pred_check_branch
          %210 = sbr.rel (%p208) target = $region28
        $region27: #{tpu_custom_call.1} parent=23 // pred_region
          %s211 = sand.u32 %s41, 1
          %s212 = scalar_lea.sflag [#allocation3], %s211
          %s213 = sand.u32 %s41, 1
          %s214 = smul.addr %s213, 32
          %s215 = scalar_lea.vmem [#allocation2], %s214
          %s216 = smul.u32 4, %s27
          %s217 = ssub.s32 10, %s216
          %p218 = scmp.lt.s32.totalorder %s217, 4
          %s219 = scalar_select %p218, %s217, 4
          %s220 = smul.u32 8, %s219
          %s221 = ssub.s32 32, %s220
          %s222 = sshll.u32 %s221, 4
          %223 = vsyncadd %s212, %s222
          %p224 = scmp.ne.s32.totalorder 0, %s220
          %s225 = smul.addr %s216, 8
          %s226 = scalar_lea.hbm %s0, %s225
          %s227 = smul.u32 8, %s219
          %s228 = sshll.u32 %s226, 4
          %s229 = int_to_ptr.hbm [resolvable:$true] %s228
          %s230 = sshll.u32 %s215, 4
          %s231 = int_to_ptr.vmem [resolvable:$true] %s230
          %s232 = sshll.u32 %s227, 4
          %236 = dma.hbm_to_vmem [thread:$0]  (%p224), %s229, %s232, %s231, %s212, 128, 128, 8
        $region28: #{tpu_custom_call.1} parent=23 // pred_fallthru
          _
        // Predicated region
        $region29: #{tpu_custom_call.1} parent=23 // pred_check
          %p237 = pneg %p81
        $region30: #{tpu_custom_call.1} parent=23 // pred_check_branch
          %239 = sbr.rel (%p237) target = $region32
        $region31: #{tpu_custom_call.1} parent=23 // pred_region
          %s240 = sand.u32 %s19, 1
          %s241 = scalar_lea.sflag [#allocation6], %s240
          %s242 = sand.u32 %s71, 1
          %s243 = smul.addr %s242, 16
          %s244 = scalar_lea.vmem [#allocation5], %s243
          %s245 = sadd.s32 %s27, 1
          %s246 = smul.u32 %s245, 2
          %s247 = smul.u32 2, %s246
          %249 = vsyncadd %s241, 0
          %s250 = smul.addr %s247, 8
          %s251 = scalar_lea.hbm %s1, %s250
          %s252 = sshll.u32 %s251, 4
          %s253 = int_to_ptr.hbm [resolvable:$true] %s252
          %s254 = sshll.u32 %s244, 4
          %s255 = int_to_ptr.vmem [resolvable:$true] %s254
          %260 = dma.hbm_to_vmem [thread:$0]  %s253, 256, %s255, %s241, 128, 128, 8
        $region32: #{tpu_custom_call.1} parent=23 // pred_fallthru
          _
      $region24: #{tpu_custom_call.1} parent=5 // pred_fallthru
        _
      %p261 = scmp.le.s32.totalorder 1, %s19
      %p262 = scmp.lt.s32.totalorder %s19, 3
      %p263 = pnand %p261, %p262
      %p264 = pneg %p263
      // Predicated region
      $region33: #{tpu_custom_call.1} parent=5 // pred_check
        _
      $region34: #{tpu_custom_call.1} parent=5 // pred_check_branch
        %266 = sbr.rel (%p263) target = $region36
      $region35: #{tpu_custom_call.1} parent=5 // pred_region
        %s267 = ssub.s32 %s19, 1
        %s268 = sand.u32 %s44, 1
        %s269 = scalar_lea.sflag [#allocation3], %s268
        %s270 = sand.u32 %s44, 1
        %s271 = smul.addr %s270, 32
        %s272 = scalar_lea.vmem [#allocation2], %s271
        // Predicated region
        $region37: #{tpu_custom_call.1} parent=35 // pred_check
          %p273 = pneg %p57
        $region38: #{tpu_custom_call.1} parent=35 // pred_check_branch
          %275 = sbr.rel (%p273) target = $region40
        $region39: #{tpu_custom_call.1} parent=35 // pred_region
          %277 = dma.done %s269, 512
        $region40: #{tpu_custom_call.1} parent=35 // pred_fallthru
          _
        %s278 = sand.u32 %s24, 1
        %s279 = scalar_lea.sflag [#allocation6], %s278
        %s280 = sand.u32 %s74, 1
        %s281 = smul.addr %s280, 16
        %s282 = scalar_lea.vmem [#allocation5], %s281
        // Predicated region
        $region41: #{tpu_custom_call.1} parent=35 // pred_check
          %p283 = pneg %p87
        $region42: #{tpu_custom_call.1} parent=35 // pred_check_branch
          %285 = sbr.rel (%p283) target = $region44
        $region43: #{tpu_custom_call.1} parent=35 // pred_region
          %287 = dma.done %s279, 256
        $region44: #{tpu_custom_call.1} parent=35 // pred_fallthru
          _
        // Predicated region
        $region45: #{tpu_custom_call.1} parent=35 // pred_check
          %p288 = pneg %p113
        $region46: #{tpu_custom_call.1} parent=35 // pred_check_branch
          %290 = sbr.rel (%p288) target = $region48
        $region47: #{tpu_custom_call.1} parent=35 // pred_region
          %292 = dma.done [#allocation6], 6144
        $region48: #{tpu_custom_call.1} parent=35 // pred_fallthru
          _
        %s293 = sand.u32 %s44, 1
        %s294 = scalar_lea.sflag [#allocation3], %s293
        %s295 = sand.u32 %s44, 1
        %s296 = smul.addr %s295, 32
        %s297 = scalar_lea.vmem [#allocation2], %s296
        %p298 = pneg %p57
        %p299 = pneg %p54
        %s300 = sand.u32 %s24, 1
        %s301 = scalar_lea.sflag [#allocation6], %s300
        %s302 = sand.u32 %s74, 1
        %s303 = smul.addr %s302, 16
        %s304 = scalar_lea.vmem [#allocation5], %s303
        %p305 = pneg %p87
        %p306 = pneg %p84
        %p307 = pneg %p113
        %p308 = pneg %p110
        %p309 = scmp.lt.s32.totalorder %s28, 0
        %s310 = scalar_select %p309, %s28, 0
        %s311 = scalar_lea.vmem %s3, %s310
        %p312 = pneg %p139
        %p313 = pneg %p136
        %p314 = pneg %p167
        %p315 = pneg %p164
        %s316 = sand.u32 %s154, 1
        %s317 = scalar_lea.sflag [#allocation4], %s316
        %s318 = sand.u32 %s154, 1
        %s319 = smul.addr %s318, 32
        %s320 = scalar_lea.vmem [#allocation8], %s319
        %s321 = smul.u32 4, %s29
        %s322 = ssub.s32 10, %s321
        %p323 = scmp.lt.s32.totalorder %s322, 4
        %s324 = scalar_select %p323, %s322, 4
        %s325 = smul.u32 8, %s324
        %s326 = sadd.s32 %s29, 1
        %s327 = smul.u32 %s326, 2
        %s328 = smul.u32 2, %s327
        %p329 = scmp.lt.s32.totalorder %s28, 0
        %s330 = scalar_select %p329, %s28, 0
        %s331 = scalar_lea.vmem %s3, %s330
        %s332 = smul.u32 4, %s29
        %v333 = vld [vmem:[%s272] sm:$0xff]
        %v334 = vld [vmem:[%s272 + $0x8] sm:$0xff]
        %v335 = vld [vmem:[%s272 + $0x10] sm:$0xff]
        %v336 = vld [vmem:[%s272 + $0x18] sm:$0xff]
        %v337 = vld [vmem:[#allocation7] sm:$0xff]
        %v338 = vld [vmem:[#allocation7 + $0x8] sm:$0xff]
        %v339 = vld [vmem:[#allocation7 + $0x10] sm:$0xff]
        %v340 = vld [vmem:[#allocation7 + $0x18] sm:$0xff]
        %v341 = vld [vmem:[#allocation7 + $0x20] sm:$0xff]
        %v342 = vld [vmem:[#allocation7 + $0x28] sm:$0xff]
        %v343 = vld [vmem:[#allocation7 + $0x30] sm:$0xff]
        %v344 = vld [vmem:[#allocation7 + $0x38] sm:$0xff]
        %v345 = vld [vmem:[#allocation7 + $0x40] sm:$0xff]
        %v346 = vld [vmem:[#allocation7 + $0x48] sm:$0xff]
        %v347 = vld [vmem:[#allocation7 + $0x50] sm:$0xff]
        %v348 = vld [vmem:[#allocation7 + $0x58] sm:$0xff]
        %v349 = vld [vmem:[#allocation7 + $0x60] sm:$0xff]
        %v350 = vld [vmem:[#allocation7 + $0x68] sm:$0xff]
        %v351 = vld [vmem:[#allocation7 + $0x70] sm:$0xff]
        %v352 = vld [vmem:[#allocation7 + $0x78] sm:$0xff]
        %v353 = vld [vmem:[%s282] sm:$0xff]
        %s354 = scalar_lea.vmem [#allocation7], 128
        %v355 = vld [vmem:[%s354] sm:$0xff]
        %v356 = vld [vmem:[%s354 + $0x8] sm:$0xff]
        %v357 = vld [vmem:[%s354 + $0x10] sm:$0xff]
        %v358 = vld [vmem:[%s354 + $0x18] sm:$0xff]
        %v359 = vld [vmem:[%s354 + $0x20] sm:$0xff]
        %v360 = vld [vmem:[%s354 + $0x28] sm:$0xff]
        %v361 = vld [vmem:[%s354 + $0x30] sm:$0xff]
        %v362 = vld [vmem:[%s354 + $0x38] sm:$0xff]
        %v363 = vld [vmem:[%s354 + $0x40] sm:$0xff]
        %v364 = vld [vmem:[%s354 + $0x48] sm:$0xff]
        %v365 = vld [vmem:[%s354 + $0x50] sm:$0xff]
        %v366 = vld [vmem:[%s354 + $0x58] sm:$0xff]
        %v367 = vld [vmem:[%s354 + $0x60] sm:$0xff]
        %v368 = vld [vmem:[%s354 + $0x68] sm:$0xff]
        %v369 = vld [vmem:[%s354 + $0x70] sm:$0xff]
        %v370 = vld [vmem:[%s354 + $0x78] sm:$0xff]
        %371 = vmatpush.msra.mxu0 %v370
        %372 = vmatpush.msra.mxu0 %v369
        %373 = vmatpush.msra.mxu0 %v368
        %374 = vmatpush.msra.mxu0 %v367
        %375 = vmatpush.msra.mxu0 %v366
        %376 = vmatpush.msra.mxu0 %v365
        %377 = vmatpush.msra.mxu0 %v364
        %378 = vmatpush.msra.mxu0 %v363
        %379 = vmatpush.msra.mxu0 %v362
        %380 = vmatpush.msra.mxu0 %v361
        %381 = vmatpush.msra.mxu0 %v360
        %382 = vmatpush.msra.mxu0 %v359
        %383 = vmatpush.msra.mxu0 %v358
        %384 = vmatpush.msra.mxu0 %v357
        %385 = vmatpush.msra.mxu0 %v356
        %386 = vmatpush.msra.mxu0 %v355
        %387 = vmatmul.f32.gmra.mxu0 %v334
        %v388 = vpop.f32.mrf.mxu0
        %v389 = vadd.f32 0.0, %v388
        %390 = vmatmul.f32.gmra.mxu0 %v335
        %v391 = vpop.f32.mrf.mxu0
        %v392 = vadd.f32 0.0, %v391
        %393 = vmatmul.f32.gmra.mxu0 %v336
        %v394 = vpop.f32.mrf.mxu0
        %v395 = vadd.f32 0.0, %v394
        %396 = vmatmul.f32.gmra.mxu0 %v353
        %v397 = vpop.f32.mrf.mxu0
        %v398 = vadd.f32 0.0, %v397
        %399 = vdwg.mxu0
        %400 = vmatpush.msra.mxu0 %v352
        %401 = vmatpush.msra.mxu0 %v351
        %402 = vmatpush.msra.mxu0 %v350
        %403 = vmatpush.msra.mxu0 %v349
        %404 = vmatpush.msra.mxu0 %v348
        %405 = vmatpush.msra.mxu0 %v347
        %406 = vmatpush.msra.mxu0 %v346
        %407 = vmatpush.msra.mxu0 %v345
        %408 = vmatpush.msra.mxu0 %v344
        %409 = vmatpush.msra.mxu0 %v343
        %410 = vmatpush.msra.mxu0 %v342
        %411 = vmatpush.msra.mxu0 %v341
        %412 = vmatpush.msra.mxu0 %v340
        %413 = vmatpush.msra.mxu0 %v339
        %414 = vmatpush.msra.mxu0 %v338
        %415 = vmatpush.msra.mxu0 %v337
        %416 = vmatmul.f32.gmra.mxu0 %v333
        %v417 = vpop.f32.mrf.mxu0
        %v418 = vadd.f32 %v389, %v417
        %419 = vmatmul.f32.gmra.mxu0 %v334
        %v420 = vpop.f32.mrf.mxu0
        %v421 = vadd.f32 %v392, %v420
        %422 = vmatmul.f32.gmra.mxu0 %v335
        %v423 = vpop.f32.mrf.mxu0
        %v424 = vadd.f32 %v395, %v423
        %425 = vmatmul.f32.gmra.mxu0 %v336
        %v426 = vpop.f32.mrf.mxu0
        %v427 = vadd.f32 %v398, %v426
        %428 = vdwg.mxu0
        %v429 = vld [vmem:[%s282] sm:$0xff]
        %v430 = vld [vmem:[%s282 + $0x8] sm:$0xff]
        %s431 = scalar_lea.vmem [#allocation7], 256
        %v432 = vld [vmem:[%s431] sm:$0xff]
        %v433 = vld [vmem:[%s431 + $0x8] sm:$0xff]
        %v434 = vld [vmem:[%s431 + $0x10] sm:$0xff]
        %v435 = vld [vmem:[%s431 + $0x18] sm:$0xff]
        %v436 = vld [vmem:[%s431 + $0x20] sm:$0xff]
        %v437 = vld [vmem:[%s431 + $0x28] sm:$0xff]
        %v438 = vld [vmem:[%s431 + $0x30] sm:$0xff]
        %v439 = vld [vmem:[%s431 + $0x38] sm:$0xff]
        %v440 = vld [vmem:[%s431 + $0x40] sm:$0xff]
        %v441 = vld [vmem:[%s431 + $0x48] sm:$0xff]
        %v442 = vld [vmem:[%s431 + $0x50] sm:$0xff]
        %v443 = vld [vmem:[%s431 + $0x58] sm:$0xff]
        %v444 = vld [vmem:[%s431 + $0x60] sm:$0xff]
        %v445 = vld [vmem:[%s431 + $0x68] sm:$0xff]
        %v446 = vld [vmem:[%s431 + $0x70] sm:$0xff]
        %v447 = vld [vmem:[%s431 + $0x78] sm:$0xff]
        %448 = vmatpush.msra.mxu0 %v447
        %449 = vmatpush.msra.mxu0 %v446
        %450 = vmatpush.msra.mxu0 %v445
        %451 = vmatpush.msra.mxu0 %v444
        %452 = vmatpush.msra.mxu0 %v443
        %453 = vmatpush.msra.mxu0 %v442
        %454 = vmatpush.msra.mxu0 %v441
        %455 = vmatpush.msra.mxu0 %v440
        %456 = vmatpush.msra.mxu0 %v439
        %457 = vmatpush.msra.mxu0 %v438
        %458 = vmatpush.msra.mxu0 %v437
        %459 = vmatpush.msra.mxu0 %v436
        %460 = vmatpush.msra.mxu0 %v435
        %461 = vmatpush.msra.mxu0 %v434
        %462 = vmatpush.msra.mxu0 %v433
        %463 = vmatpush.msra.mxu0 %v432
        %464 = vmatmul.f32.gmra.mxu0 %v335
        %v465 = vpop.f32.mrf.mxu0
        %v466 = vadd.f32 0.0, %v465
        %467 = vmatmul.f32.gmra.mxu0 %v336
        %v468 = vpop.f32.mrf.mxu0
        %v469 = vadd.f32 0.0, %v468
        %470 = vmatmul.f32.gmra.mxu0 %v429
        %v471 = vpop.f32.mrf.mxu0
        %v472 = vadd.f32 0.0, %v471
        %473 = vmatmul.f32.gmra.mxu0 %v430
        %v474 = vpop.f32.mrf.mxu0
        %v475 = vadd.f32 0.0, %v474
        %476 = vdwg.mxu0
        %v477 = vadd.f32 %v418, %v466
        %v478 = vadd.f32 %v421, %v469
        %v479 = vadd.f32 %v424, %v472
        %v480 = vadd.f32 %v427, %v475
        %v481 = vld [vmem:[%s331] sm:$0x1]
        %v483 = vperm.slane %v481, 0
        %v485 = vadd.f32 %v477, %v483
        %v486 = vadd.f32 %v478, %v483
        %v487 = vadd.f32 %v479, %v483
        %v488 = vadd.f32 %v480, %v483
        %489 = vst [vmem:[%s320] sm:$0xff] %v485
        %490 = vst [vmem:[%s320 + $0x8] sm:$0xff] %v486
        %491 = vst [vmem:[%s320 + $0x10] sm:$0xff] %v487
        %492 = vst [vmem:[%s320 + $0x18] sm:$0xff] %v488
        %s493 = sand.u32 %s154, 1
        %s494 = scalar_lea.sflag [#allocation4], %s493
        %s495 = sand.u32 %s154, 1
        %s496 = smul.addr %s495, 32
        %s497 = scalar_lea.vmem [#allocation8], %s496
        // Predicated region
        $region49: #{tpu_custom_call.1} parent=35 // pred_check
          %p498 = pneg %p164
        $region50: #{tpu_custom_call.1} parent=35 // pred_check_branch
          %500 = sbr.rel (%p498) target = $region52
        $region51: #{tpu_custom_call.1} parent=35 // pred_region
          %s501 = smul.u32 4, %s29
          %503 = vsyncadd %s494, 0
          %s504 = sadd.s32 %s28, %s501
          %s505 = smul.addr %s504, 8
          %s506 = scalar_lea.hbm %s4, %s505
          %s507 = sshll.u32 %s497, 4
          %s508 = int_to_ptr.vmem [resolvable:$true] %s507
          %s509 = sshll.u32 %s506, 4
          %s510 = int_to_ptr.hbm [resolvable:$true] %s509
          %515 = dma.vmem_to_hbm [thread:$0]  %s508, 512, %s510, %s494, 128, 128, 8
        $region52: #{tpu_custom_call.1} parent=35 // pred_fallthru
          _
      $region36: #{tpu_custom_call.1} parent=5 // pred_fallthru
        _
      %p516 = scmp.le.s32.totalorder 2, %s19
      // Predicated region
      $region53: #{tpu_custom_call.1} parent=5 // pred_check
        %p517 = pneg %p516
      $region54: #{tpu_custom_call.1} parent=5 // pred_check_branch
        %519 = sbr.rel (%p517) target = $region56
      $region55: #{tpu_custom_call.1} parent=5 // pred_region
        %s520 = ssub.s32 %s19, 2
        // Predicated region
        $region57: #{tpu_custom_call.1} parent=55 // pred_check
          %p521 = pneg %p170
        $region58: #{tpu_custom_call.1} parent=55 // pred_check_branch
          %523 = sbr.rel (%p521) target = $region60
        $region59: #{tpu_custom_call.1} parent=55 // pred_region
          %s524 = sand.u32 %s155, 1
          %s525 = scalar_lea.sflag [#allocation4], %s524
          %s526 = sand.u32 %s155, 1
          %s527 = smul.addr %s526, 32
          %s528 = scalar_lea.vmem [#allocation8], %s527
          %530 = dma.done %s525, 512
        $region60: #{tpu_custom_call.1} parent=55 // pred_fallthru
          _
      $region56: #{tpu_custom_call.1} parent=5 // pred_fallthru
        _
    $region6: #{tpu_custom_call.1} parent=1 // loop_footer
      %s23 = sadd.s32 1, %s19
    $region7: #{tpu_custom_call.1} parent=1 // loop_footer_branch
      %18 = sbr.rel target = $region3
    $region8: #{tpu_custom_call.1} parent=1 // loop_exit
      _
    %531 = vsyncpa [#allocation3], 1
    %s532 = scalar_lea.sflag [#allocation3], 1
    %533 = vsyncpa %s532, 1
    %534 = vsyncpa [#allocation6], 1
    %s535 = scalar_lea.sflag [#allocation6], 1
    %536 = vsyncpa %s535, 1
    %537 = vsyncpa [#allocation4], 1
    %s538 = scalar_lea.sflag [#allocation4], 1
    %539 = vsyncpa %s538, 1

</llo_original>
